<compile_context>
chip_gen: v7x
topology: tpu7x:2x2x1
jax: 0.10.0
libtpu: 0.0.40
codegen_flags: <defaults>
</compile_context>

<pallas_src>
import functools

import jax
import jax.numpy as jnp
from jax.experimental import pallas as pl
from jax.experimental.pallas import tpu as pltpu


def mlp_kernel(x_ref, w1_ref, b1_ref, w2_ref, b2_ref, w3_ref, b3_ref, o_ref):
    # x arrives f32; cast to bf16 in-kernel (VPU work, hidden under MXU/DMA).
    x = x_ref[...].astype(jnp.bfloat16)

    # Linear(fold*32 -> fold*64) + ReLU        (block-diag folded weights)
    h = jnp.dot(x, w1_ref[...], preferred_element_type=jnp.float32) + b1_ref[...]
    h = jnp.maximum(h, 0.0)

    # Linear(fold*64 -> fold*64) + Tanh
    h = jnp.dot(h.astype(jnp.bfloat16), w2_ref[...],
                preferred_element_type=jnp.float32) + b2_ref[...]
    h = jnp.tanh(h)

    # final Linear(fold*64 -> fold*16), no trailing activation
    out = jnp.dot(h.astype(jnp.bfloat16), w3_ref[...],
                  preferred_element_type=jnp.float32) + b3_ref[...]
    o_ref[...] = out.astype(o_ref.dtype)


def _pick_fold(batch):
    """Block-diagonal fold factor: match MXU width; must divide the batch."""
    try:
        kind = jax.devices()[0].device_kind.lower()
    except Exception:
        kind = ""
    # 128-wide MXU generations -> fold 2; 256-wide (v6e/v7x) -> fold 4.
    max_fold = 2 if any(v in kind for v in ("v2", "v3", "v4", "v5")) else 4
    for f in (4, 2, 1):
        if f <= max_fold and batch % f == 0:
            return f
    return 1


@functools.partial(jax.jit, static_argnames=("fold", "block_b"))
def _base_mlp_forward(x, w1, b1, w2, b2, w3, b3, *, fold, block_b):
    B, d_in = x.shape
    d_h1 = w1.shape[1]
    d_h2 = w2.shape[1]
    d_out = w3.shape[1]
    out_dtype = x.dtype

    # ---- block-diagonal folding of the (tiny) weights / biases.
    def fold_w(w):
        if fold == 1:
            return w.astype(jnp.bfloat16)
        return jnp.kron(jnp.eye(fold, dtype=w.dtype), w).astype(jnp.bfloat16)

    def fold_b(b):
        b = b.astype(jnp.float32)
        return b if fold == 1 else jnp.tile(b, (1, fold))

    w1f, w2f, w3f = fold_w(w1), fold_w(w2), fold_w(w3)
    b1f, b2f, b3f = fold_b(b1), fold_b(b2), fold_b(b3)

    # ---- fold the batch: (B, d_in) -> (B/fold, fold*d_in). Free contiguous reshape.
    B_f = B // fold
    d_in_f, d_h1_f = d_in * fold, d_h1 * fold
    d_h2_f, d_out_f = d_h2 * fold, d_out * fold
    xf = x.reshape(B_f, d_in_f)

    # ---- batch tiling: large tiles; partial tail block handled by Pallas.
    rows = max(1, min(block_b // fold, B_f))
    if rows < B_f:
        rows = max(8, (rows // 8) * 8)  # multiple-of-8 sublane blocks when tiling
    grid = (pl.cdiv(B_f, rows),)

    # weights / biases: constant index map -> fetched once, revisited each step.
    const = lambda shape: pl.BlockSpec(shape, lambda i: (0, 0))

    out = pl.pallas_call(
        mlp_kernel,
        out_shape=jax.ShapeDtypeStruct((B_f, d_out_f), out_dtype),
        grid_spec=pltpu.PrefetchScalarGridSpec(
            num_scalar_prefetch=0,
            grid=grid,
            in_specs=[
                pl.BlockSpec((rows, d_in_f), lambda i: (i, 0)),  # x tile (f32)
                const((d_in_f, d_h1_f)),
                const((1, d_h1_f)),
                const((d_h1_f, d_h2_f)),
                const((1, d_h2_f)),
                const((d_h2_f, d_out_f)),
                const((1, d_out_f)),
            ],
            out_specs=pl.BlockSpec((rows, d_out_f), lambda i: (i, 0)),
        ),
        compiler_params=pltpu.CompilerParams(
            dimension_semantics=("parallel",),
            vmem_limit_bytes=32 * 1024 * 1024,
        ),
    )(xf, w1f, b1f, w2f, b2f, w3f, b3f)

    # Unfold: (B/fold, fold*d_out) -> (B, d_out). Free contiguous reshape.
    return out.reshape(B, d_out)


def base_mlp_forward(x, w1, b1, w2, b2, w3, b3, *, block_b=4096):
    fold = _pick_fold(x.shape[0])
    return _base_mlp_forward(x, w1, b1, w2, b2, w3, b3, fold=fold, block_b=block_b)


def init_linear(key, fan_in, fan_out):
    """Deterministic init mimicking torch.nn.Linear defaults."""
    kw, kb = jax.random.split(key)
    bound = 1.0 / jnp.sqrt(fan_in)
    # stored transposed: (in, out) so y = x @ W + b
    w = jax.random.uniform(kw, (fan_in, fan_out), jnp.float32, -bound, bound)
    b = jax.random.uniform(kb, (1, fan_out), jnp.float32, -bound, bound)
    return w, b


def reference_forward(x, w1, b1, w2, b2, w3, b3):
    """Pure-JAX reference mirroring the kernel's bf16-MXU / f32-accumulate math."""
    bf = jnp.bfloat16
    h = jnp.dot(x.astype(bf), w1.astype(bf), preferred_element_type=jnp.float32) + b1
    h = jnp.maximum(h, 0.0)
    h = jnp.dot(h.astype(bf), w2.astype(bf), preferred_element_type=jnp.float32) + b2
    h = jnp.tanh(h)
    return jnp.dot(h.astype(bf), w3.astype(bf), preferred_element_type=jnp.float32) + b3


if __name__ == "__main__":
    # definition = [32, 64, 'relu', 64, 'tanh', 16]
    d_in, d_h1, d_h2, d_out = 32, 64, 64, 16
    batch = 200  # small; divisible by 4, so the block-diagonal fold path runs

    key = jax.random.PRNGKey(0)
    kx, k1, k2, k3 = jax.random.split(key, 4)

    x = jax.random.normal(kx, (batch, d_in), jnp.float32)
    w1, b1 = init_linear(k1, d_in, d_h1)
    w2, b2 = init_linear(k2, d_h1, d_h2)
    w3, b3 = init_linear(k3, d_h2, d_out)

    out = base_mlp_forward(x, w1, b1, w2, b2, w3, b3)
    out = jax.block_until_ready(out)

    ref = reference_forward(x, w1, b1, w2, b2, w3, b3)
    assert out.shape == (batch, d_out), out.shape
    assert out.dtype == x.dtype
    # bf16-streamed matmul inputs (f32 accumulation) -> loose-ish tolerance.
    assert jnp.allclose(out, ref, atol=2e-2, rtol=2e-2), "mismatch vs JAX reference"

    print("KERNEL_OK")
</pallas_src>

<mosaic_0001>
module attributes {stable_mosaic.version = 11 : i64} {
  func.func @mlp_kernel(%arg0: i32, %arg1: memref<50x128xf32, #tpu.memory_space<vmem>>, %arg2: memref<128x256xbf16, #tpu.memory_space<vmem>>, %arg3: memref<1x256xf32, #tpu.memory_space<vmem>>, %arg4: memref<256x256xbf16, #tpu.memory_space<vmem>>, %arg5: memref<1x256xf32, #tpu.memory_space<vmem>>, %arg6: memref<256x64xbf16, #tpu.memory_space<vmem>>, %arg7: memref<1x64xf32, #tpu.memory_space<vmem>>, %arg8: memref<50x64xf32, #tpu.memory_space<vmem>>) attributes {dimension_semantics = [#tpu.dimension_semantics<parallel>], iteration_bounds = array<i64: 1>, scalar_prefetch = 0 : i64, scratch_operands = 0 : i64, tpu.core_type = #tpu.core_type<tc>, window_params = [{transform_indices = @transform_0, window_bounds = array<i64: 50, 128>}, {pipeline_mode = #tpu.pipeline_mode<synchronous>, transform_indices = @transform_1, window_bounds = array<i64: 128, 256>}, {pipeline_mode = #tpu.pipeline_mode<synchronous>, transform_indices = @transform_2, window_bounds = array<i64: 1, 256>}, {pipeline_mode = #tpu.pipeline_mode<synchronous>, transform_indices = @transform_3, window_bounds = array<i64: 256, 256>}, {pipeline_mode = #tpu.pipeline_mode<synchronous>, transform_indices = @transform_4, window_bounds = array<i64: 1, 256>}, {pipeline_mode = #tpu.pipeline_mode<synchronous>, transform_indices = @transform_5, window_bounds = array<i64: 256, 64>}, {pipeline_mode = #tpu.pipeline_mode<synchronous>, transform_indices = @transform_6, window_bounds = array<i64: 1, 64>}, {transform_indices = @transform_7, window_bounds = array<i64: 50, 64>}]} {
    %c0 = arith.constant 0 : index
    %c0_0 = arith.constant 0 : index
    %0 = vector.load %arg1[%c0, %c0_0] : memref<50x128xf32, #tpu.memory_space<vmem>>, vector<50x128xf32>
    %1 = arith.truncf %0 : vector<50x128xf32> to vector<50x128xbf16>
    %c0_1 = arith.constant 0 : index
    %c0_2 = arith.constant 0 : index
    %2 = vector.load %arg2[%c0_1, %c0_2] : memref<128x256xbf16, #tpu.memory_space<vmem>>, vector<128x256xbf16>
    %cst = arith.constant dense<0.000000e+00> : vector<50x256xf32>
    %3 = tpu.matmul %1, %2, %cst {dimension_numbers = #tpu.dot_dimension_numbers<[1], [0], [0], [1], [0, 0, 1, 1], [], []>} : vector<50x128xbf16>, vector<128x256xbf16>, vector<50x256xf32> -> vector<50x256xf32>
    %c0_3 = arith.constant 0 : index
    %c0_4 = arith.constant 0 : index
    %4 = vector.load %arg3[%c0_3, %c0_4] : memref<1x256xf32, #tpu.memory_space<vmem>>, vector<1x256xf32>
    %5 = vector.broadcast %4 : vector<1x256xf32> to vector<50x256xf32>
    %6 = arith.addf %3, %5 : vector<50x256xf32>
    %cst_5 = arith.constant 0.000000e+00 : f32
    %7 = vector.broadcast %cst_5 : f32 to vector<50x256xf32>
    %8 = arith.maximumf %6, %7 : vector<50x256xf32>
    %9 = arith.truncf %8 : vector<50x256xf32> to vector<50x256xbf16>
    %c0_6 = arith.constant 0 : index
    %c0_7 = arith.constant 0 : index
    %10 = vector.load %arg4[%c0_6, %c0_7] : memref<256x256xbf16, #tpu.memory_space<vmem>>, vector<256x256xbf16>
    %cst_8 = arith.constant dense<0.000000e+00> : vector<50x256xf32>
    %11 = tpu.matmul %9, %10, %cst_8 {dimension_numbers = #tpu.dot_dimension_numbers<[1], [0], [0], [1], [0, 0, 1, 1], [], []>} : vector<50x256xbf16>, vector<256x256xbf16>, vector<50x256xf32> -> vector<50x256xf32>
    %c0_9 = arith.constant 0 : index
    %c0_10 = arith.constant 0 : index
    %12 = vector.load %arg5[%c0_9, %c0_10] : memref<1x256xf32, #tpu.memory_space<vmem>>, vector<1x256xf32>
    %13 = vector.broadcast %12 : vector<1x256xf32> to vector<50x256xf32>
    %14 = arith.addf %11, %13 : vector<50x256xf32>
    %15 = math.tanh %14 : vector<50x256xf32>
    %16 = arith.truncf %15 : vector<50x256xf32> to vector<50x256xbf16>
    %c0_11 = arith.constant 0 : index
    %c0_12 = arith.constant 0 : index
    %17 = vector.load %arg6[%c0_11, %c0_12] : memref<256x64xbf16, #tpu.memory_space<vmem>>, vector<256x64xbf16>
    %cst_13 = arith.constant dense<0.000000e+00> : vector<50x64xf32>
    %18 = tpu.matmul %16, %17, %cst_13 {dimension_numbers = #tpu.dot_dimension_numbers<[1], [0], [0], [1], [0, 0, 1, 1], [], []>} : vector<50x256xbf16>, vector<256x64xbf16>, vector<50x64xf32> -> vector<50x64xf32>
    %c0_14 = arith.constant 0 : index
    %c0_15 = arith.constant 0 : index
    %19 = vector.load %arg7[%c0_14, %c0_15] : memref<1x64xf32, #tpu.memory_space<vmem>>, vector<1x64xf32>
    %20 = vector.broadcast %19 : vector<1x64xf32> to vector<50x64xf32>
    %21 = arith.addf %18, %20 : vector<50x64xf32>
    %c0_16 = arith.constant 0 : index
    %c0_17 = arith.constant 0 : index
    %22 = vector.load %arg8[%c0_16, %c0_17] : memref<50x64xf32, #tpu.memory_space<vmem>>, vector<50x64xf32>
    tpu.vector_store %arg8[%c0_16, %c0_17], %21 {strides = array<i32>} : memref<50x64xf32, #tpu.memory_space<vmem>>, vector<50x64xf32>,
    return
  }
  func.func @transform_0(%arg0: i32) -> (i32, i32) {
    %c0_i32 = arith.constant 0 : i32
    %c0_i32_0 = arith.constant 0 : i32
    return %arg0, %c0_i32 : i32, i32
  }
  func.func @transform_1(%arg0: i32) -> (i32, i32) {
    %c0_i32 = arith.constant 0 : i32
    %c0_i32_0 = arith.constant 0 : i32
    %c0_i32_1 = arith.constant 0 : i32
    return %c0_i32, %c0_i32_0 : i32, i32
  }
  func.func @transform_2(%arg0: i32) -> (i32, i32) {
    %c0_i32 = arith.constant 0 : i32
    %c0_i32_0 = arith.constant 0 : i32
    %c0_i32_1 = arith.constant 0 : i32
    return %c0_i32, %c0_i32_0 : i32, i32
  }
  func.func @transform_3(%arg0: i32) -> (i32, i32) {
    %c0_i32 = arith.constant 0 : i32
    %c0_i32_0 = arith.constant 0 : i32
    %c0_i32_1 = arith.constant 0 : i32
    return %c0_i32, %c0_i32_0 : i32, i32
  }
  func.func @transform_4(%arg0: i32) -> (i32, i32) {
    %c0_i32 = arith.constant 0 : i32
    %c0_i32_0 = arith.constant 0 : i32
    %c0_i32_1 = arith.constant 0 : i32
    return %c0_i32, %c0_i32_0 : i32, i32
  }
  func.func @transform_5(%arg0: i32) -> (i32, i32) {
    %c0_i32 = arith.constant 0 : i32
    %c0_i32_0 = arith.constant 0 : i32
    %c0_i32_1 = arith.constant 0 : i32
    return %c0_i32, %c0_i32_0 : i32, i32
  }
  func.func @transform_6(%arg0: i32) -> (i32, i32) {
    %c0_i32 = arith.constant 0 : i32
    %c0_i32_0 = arith.constant 0 : i32
    %c0_i32_1 = arith.constant 0 : i32
    return %c0_i32, %c0_i32_0 : i32, i32
  }
  func.func @transform_7(%arg0: i32) -> (i32, i32) {
    %c0_i32 = arith.constant 0 : i32
    %c0_i32_0 = arith.constant 0 : i32
    return %arg0, %c0_i32 : i32, i32
  }
}

</mosaic_0001>

<llo_original>
// kernel: _base_mlp_forward.1
$region0: #{_base_mlp_forward.1}
  #allocation0 [shape = 'u32[]', space=smem, size = 0x4, offset = 0x4, fixed_abs, tag = 'smem constant byte address 0x4 - core index']
  #allocation1 [shape = 'u32[144,128]{1,0:T(1,128)}', space=vmem, size = 0x12000, scoped, tag = 'internal scratch']
  %s0 = inlined_call_operand.vmem [shape: f32[50,128], index: 0, kind: input, shape index: {}]
  %s1 = inlined_call_operand.vmem [shape: bf16[128,256], index: 1, kind: input, shape index: {}]
  %s2 = inlined_call_operand.vmem [shape: f32[1,256], index: 2, kind: input, shape index: {}]
  %s3 = inlined_call_operand.vmem [shape: bf16[256,256], index: 3, kind: input, shape index: {}]
  %s4 = inlined_call_operand.vmem [shape: f32[1,256], index: 4, kind: input, shape index: {}]
  %s5 = inlined_call_operand.vmem [shape: bf16[256,64], index: 5, kind: input, shape index: {}]
  %s6 = inlined_call_operand.vmem [shape: f32[1,64], index: 6, kind: input, shape index: {}]
  %s7 = inlined_call_operand.vmem [shape: f32[50,64], index: 7, kind: output, shape index: {}]
  %s8 = sld [smem:[#allocation0]]
  $region38: #{_base_mlp_forward.1} parent=0
    _
  %s10 = ssub.s32 1, %s8
  %s11 = scalar_select 0, %s10, %s8
  // Predicated region
  $region2: #{_base_mlp_forward.1} parent=0 // pred_check
    _
  $region3: #{_base_mlp_forward.1} parent=0 // pred_check_branch
    %13 = sbr.rel (0) target = $region5
  $region4: #{_base_mlp_forward.1} parent=0 // pred_region
    _
  $region5: #{_base_mlp_forward.1} parent=0 // pred_fallthru
    _
  // Predicated region
  $region6: #{_base_mlp_forward.1} parent=0 // pred_check
    _
  $region7: #{_base_mlp_forward.1} parent=0 // pred_check_branch
    %15 = sbr.rel (0) target = $region9
  $region8: #{_base_mlp_forward.1} parent=0 // pred_region
    _
  $region9: #{_base_mlp_forward.1} parent=0 // pred_fallthru
    _
  // Predicated region
  $region10: #{_base_mlp_forward.1} parent=0 // pred_check
    _
  $region11: #{_base_mlp_forward.1} parent=0 // pred_check_branch
    %17 = sbr.rel (0) target = $region13
  $region12: #{_base_mlp_forward.1} parent=0 // pred_region
    _
  $region13: #{_base_mlp_forward.1} parent=0 // pred_fallthru
    _
  // Predicated region
  $region14: #{_base_mlp_forward.1} parent=0 // pred_check
    _
  $region15: #{_base_mlp_forward.1} parent=0 // pred_check_branch
    %19 = sbr.rel (0) target = $region17
  $region16: #{_base_mlp_forward.1} parent=0 // pred_region
    _
  $region17: #{_base_mlp_forward.1} parent=0 // pred_fallthru
    _
  // Predicated region
  $region18: #{_base_mlp_forward.1} parent=0 // pred_check
    _
  $region19: #{_base_mlp_forward.1} parent=0 // pred_check_branch
    %21 = sbr.rel (0) target = $region21
  $region20: #{_base_mlp_forward.1} parent=0 // pred_region
    _
  $region21: #{_base_mlp_forward.1} parent=0 // pred_fallthru
    _
  // Predicated region
  $region22: #{_base_mlp_forward.1} parent=0 // pred_check
    _
  $region23: #{_base_mlp_forward.1} parent=0 // pred_check_branch
    %23 = sbr.rel (0) target = $region25
  $region24: #{_base_mlp_forward.1} parent=0 // pred_region
    _
  $region25: #{_base_mlp_forward.1} parent=0 // pred_fallthru
    _
  // Predicated region
  $region26: #{_base_mlp_forward.1} parent=0 // pred_check
    _
  $region27: #{_base_mlp_forward.1} parent=0 // pred_check_branch
    %25 = sbr.rel (0) target = $region29
  $region28: #{_base_mlp_forward.1} parent=0 // pred_region
    _
  $region29: #{_base_mlp_forward.1} parent=0 // pred_fallthru
    _
  %v27 = vld [vmem:[%s0] sm:$0xff]
  %v28 = vld [vmem:[%s0 + $0x8] sm:$0xff]
  %v29 = vld [vmem:[%s0 + $0x10] sm:$0xff]
  %v30 = vld [vmem:[%s0 + $0x18] sm:$0xff]
  %v31 = vld [vmem:[%s0 + $0x20] sm:$0xff]
  %v32 = vld [vmem:[%s0 + $0x28] sm:$0xff]
  %v33 = vld [vmem:[%s0 + $0x30] sm:$0x3]
  %v34 = vpack.c.bf16 %v28, %v27
  %v35 = vpack.c.bf16 %v30, %v29
  %v36 = vpack.c.bf16 %v32, %v31
  %v37 = vpack.c.bf16 %v33, %v33
  %v38 = vld [vmem:[%s1] sm:$0xff]
  %v39 = vld [vmem:[%s1 + $0x8] sm:$0xff]
  %v40 = vld [vmem:[%s1 + $0x10] sm:$0xff]
  %v41 = vld [vmem:[%s1 + $0x18] sm:$0xff]
  %v42 = vld [vmem:[%s1 + $0x20] sm:$0xff]
  %v43 = vld [vmem:[%s1 + $0x28] sm:$0xff]
  %v44 = vld [vmem:[%s1 + $0x30] sm:$0xff]
  %v45 = vld [vmem:[%s1 + $0x38] sm:$0xff]
  %v46 = vld [vmem:[%s1 + $0x40] sm:$0xff]
  %v47 = vld [vmem:[%s1 + $0x48] sm:$0xff]
  %v48 = vld [vmem:[%s1 + $0x50] sm:$0xff]
  %v49 = vld [vmem:[%s1 + $0x58] sm:$0xff]
  %v50 = vld [vmem:[%s1 + $0x60] sm:$0xff]
  %v51 = vld [vmem:[%s1 + $0x68] sm:$0xff]
  %v52 = vld [vmem:[%s1 + $0x70] sm:$0xff]
  %v53 = vld [vmem:[%s1 + $0x78] sm:$0xff]
  %v54 = vld [vmem:[%s2] sm:$0x3]
  %v56 = vlaneseq
  %v57 = vshrl.u32 %v56, 7
  %v58 = vsub.s32 0, %v57
  %v59 = vrot.slane %v54, %v58
  %v60 = vlaneseq
  %v61 = vshrl.u32 %v60, 7
  %v62 = vsub.s32 1, %v61
  %v63 = vrot.slane %v54, %v62
  %v82 = vunpack.c.l.b16 %v38
  %v83 = vunpack.c.h.b16 %v38
  %v84 = vunpack.c.l.b16 %v39
  %v85 = vunpack.c.h.b16 %v39
  %v86 = vunpack.c.l.b16 %v40
  %v87 = vunpack.c.h.b16 %v40
  %v88 = vunpack.c.l.b16 %v41
  %v89 = vunpack.c.h.b16 %v41
  %v90 = vunpack.c.l.b16 %v42
  %v91 = vunpack.c.h.b16 %v42
  %v92 = vunpack.c.l.b16 %v43
  %v93 = vunpack.c.h.b16 %v43
  %v94 = vunpack.c.l.b16 %v44
  %v95 = vunpack.c.h.b16 %v44
  %v96 = vunpack.c.l.b16 %v45
  %v97 = vunpack.c.h.b16 %v45
  %v98 = vunpack.c.l.b16 %v46
  %v99 = vunpack.c.h.b16 %v46
  %v100 = vunpack.c.l.b16 %v47
  %v101 = vunpack.c.h.b16 %v47
  %v102 = vunpack.c.l.b16 %v48
  %v103 = vunpack.c.h.b16 %v48
  %v104 = vunpack.c.l.b16 %v49
  %v105 = vunpack.c.h.b16 %v49
  %v106 = vunpack.c.l.b16 %v50
  %v107 = vunpack.c.h.b16 %v50
  %v108 = vunpack.c.l.b16 %v51
  %v109 = vunpack.c.h.b16 %v51
  %v110 = vunpack.c.l.b16 %v52
  %v111 = vunpack.c.h.b16 %v52
  %v112 = vunpack.c.l.b16 %v53
  %v113 = vunpack.c.h.b16 %v53
  %v114 = vpack.c.b16 %v84, %v82
  %v115 = vpack.c.b16 %v85, %v83
  %v116 = vpack.c.b16 %v88, %v86
  %v117 = vpack.c.b16 %v89, %v87
  %v118 = vpack.c.b16 %v92, %v90
  %v119 = vpack.c.b16 %v93, %v91
  %v120 = vpack.c.b16 %v96, %v94
  %v121 = vpack.c.b16 %v97, %v95
  %v122 = vpack.c.b16 %v100, %v98
  %v123 = vpack.c.b16 %v101, %v99
  %v124 = vpack.c.b16 %v104, %v102
  %v125 = vpack.c.b16 %v105, %v103
  %v126 = vpack.c.b16 %v108, %v106
  %v127 = vpack.c.b16 %v109, %v107
  %v128 = vpack.c.b16 %v112, %v110
  %v129 = vpack.c.b16 %v113, %v111
  %146 = vmatprep.subr.bf16.mxu0 %v115
  %147 = vmatpush1.bf16.msra.mxu0 %v114
  %148 = vmatprep.subr.bf16.mxu0 %v117
  %149 = vmatpush1.bf16.msra.mxu0 %v116
  %150 = vmatprep.subr.bf16.mxu0 %v119
  %151 = vmatpush1.bf16.msra.mxu0 %v118
  %152 = vmatprep.subr.bf16.mxu0 %v121
  %153 = vmatpush1.bf16.msra.mxu0 %v120
  %154 = vmatprep.subr.bf16.mxu0 %v123
  %155 = vmatpush1.bf16.msra.mxu0 %v122
  %156 = vmatprep.subr.bf16.mxu0 %v125
  %157 = vmatpush1.bf16.msra.mxu0 %v124
  %158 = vmatprep.subr.bf16.mxu0 %v127
  %159 = vmatpush1.bf16.msra.mxu0 %v126
  %160 = vmatprep.subr.bf16.mxu0 %v129
  %161 = vmatpush1.bf16.msra.mxu0 %v128
  %162 = vmatprep.subr.bf16.mxu0 0
  %163 = vmatpush1.bf16.msra.mxu0 0
  %164 = vmatprep.subr.bf16.mxu0 0
  %165 = vmatpush1.bf16.msra.mxu0 0
  %166 = vmatprep.subr.bf16.mxu0 0
  %167 = vmatpush1.bf16.msra.mxu0 0
  %168 = vmatprep.subr.bf16.mxu0 0
  %169 = vmatpush1.bf16.msra.mxu0 0
  %170 = vmatprep.subr.bf16.mxu0 0
  %171 = vmatpush1.bf16.msra.mxu0 0
  %172 = vmatprep.subr.bf16.mxu0 0
  %173 = vmatpush1.bf16.msra.mxu0 0
  %174 = vmatprep.subr.bf16.mxu0 0
  %175 = vmatpush1.bf16.msra.mxu0 0
  %176 = vmatprep.subr.bf16.mxu0 0
  %177 = vmatpush1.bf16.msra.mxu0 0
  %178 = vmatprep.mubr.bf16.mxu0 0
  %179 = vmatmul.mubr.bf16.gmra.mrb[0].mxu0 %v34
  %v180 = vpop.f32.mrb[0].mxu0
  %v181 = vadd.f32 %v59, %v180
  %v182 = vpop.f32.mrb[0].mxu0
  %v183 = vadd.f32 %v63, %v182
  %v184 = vpop.f32.mrb[0].mxu0
  %v185 = vadd.f32 %v59, %v184
  %v186 = vpop.f32.mrb[0].mxu0
  %v187 = vadd.f32 %v63, %v186
  %188 = vmatprep.mubr.bf16.mxu0 0
  %189 = vmatmul.mubr.bf16.gmra.mrb[0].mxu0 %v35
  %v190 = vpop.f32.mrb[0].mxu0
  %v191 = vadd.f32 %v59, %v190
  %v192 = vpop.f32.mrb[0].mxu0
  %v193 = vadd.f32 %v63, %v192
  %v194 = vpop.f32.mrb[0].mxu0
  %v195 = vadd.f32 %v59, %v194
  %v196 = vpop.f32.mrb[0].mxu0
  %v197 = vadd.f32 %v63, %v196
  %198 = vmatprep.mubr.bf16.mxu0 0
  %199 = vmatmul.mubr.bf16.gmra.mrb[0].mxu0 %v36
  %v200 = vpop.f32.mrb[0].mxu0
  %v201 = vadd.f32 %v59, %v200
  %v202 = vpop.f32.mrb[0].mxu0
  %v203 = vadd.f32 %v63, %v202
  %v204 = vpop.f32.mrb[0].mxu0
  %v205 = vadd.f32 %v59, %v204
  %v206 = vpop.f32.mrb[0].mxu0
  %v207 = vadd.f32 %v63, %v206
  %208 = vmatprep.mubr.bf16.mxu0 0
  %209 = vmatmul.mubr.bf16.gmra.mrb[0].mxu0 %v37
  %v210 = vpop.f32.mrb[0].mxu0
  %v211 = vadd.f32 %v59, %v210
  %v212 = vpop.f32.mrb[0].mxu0
  %v213 = vadd.f32 %v63, %v212
  %v214 = vpop.f32.mrb[0].mxu0
  %v215 = vpop.f32.mrb[0].mxu0
  %216 = vdwg.mxu0
  %v217 = vmax.f32 %v181, 0.0
  %v218 = vmax.f32 %v183, 0.0
  %v219 = vmax.f32 %v185, 0.0
  %v220 = vmax.f32 %v187, 0.0
  %v221 = vmax.f32 %v191, 0.0
  %v222 = vmax.f32 %v193, 0.0
  %v223 = vmax.f32 %v195, 0.0
  %v224 = vmax.f32 %v197, 0.0
  %v225 = vmax.f32 %v201, 0.0
  %v226 = vmax.f32 %v203, 0.0
  %v227 = vmax.f32 %v205, 0.0
  %v228 = vmax.f32 %v207, 0.0
  %v229 = vmax.f32 %v211, 0.0
  %v230 = vmax.f32 %v213, 0.0
  %v231 = vpack.c.bf16 %v219, %v217
  %v232 = vpack.c.bf16 %v220, %v218
  %v233 = vpack.c.bf16 %v223, %v221
  %v234 = vpack.c.bf16 %v224, %v222
  %v235 = vpack.c.bf16 %v227, %v225
  %v236 = vpack.c.bf16 %v228, %v226
  %v237 = vpack.c.bf16 %v229, %v229
  %v238 = vpack.c.bf16 %v230, %v230
  %v239 = vld [vmem:[%s3] sm:$0xff]
  %v240 = vld [vmem:[%s3 + $0x8] sm:$0xff]
  %v241 = vld [vmem:[%s3 + $0x10] sm:$0xff]
  %v242 = vld [vmem:[%s3 + $0x18] sm:$0xff]
  %v243 = vld [vmem:[%s3 + $0x20] sm:$0xff]
  %v244 = vld [vmem:[%s3 + $0x28] sm:$0xff]
  %v245 = vld [vmem:[%s3 + $0x30] sm:$0xff]
  %v246 = vld [vmem:[%s3 + $0x38] sm:$0xff]
  %v247 = vld [vmem:[%s3 + $0x40] sm:$0xff]
  %v248 = vld [vmem:[%s3 + $0x48] sm:$0xff]
  %v249 = vld [vmem:[%s3 + $0x50] sm:$0xff]
  %v250 = vld [vmem:[%s3 + $0x58] sm:$0xff]
  %v251 = vld [vmem:[%s3 + $0x60] sm:$0xff]
  %v252 = vld [vmem:[%s3 + $0x68] sm:$0xff]
  %v253 = vld [vmem:[%s3 + $0x70] sm:$0xff]
  %v254 = vld [vmem:[%s3 + $0x78] sm:$0xff]
  %v255 = vld [vmem:[%s3 + $0x80] sm:$0xff]
  %v256 = vld [vmem:[%s3 + $0x88] sm:$0xff]
  %v257 = vld [vmem:[%s3 + $0x90] sm:$0xff]
  %v258 = vld [vmem:[%s3 + $0x98] sm:$0xff]
  %v259 = vld [vmem:[%s3 + $0xa0] sm:$0xff]
  %v260 = vld [vmem:[%s3 + $0xa8] sm:$0xff]
  %v261 = vld [vmem:[%s3 + $0xb0] sm:$0xff]
  %v262 = vld [vmem:[%s3 + $0xb8] sm:$0xff]
  %v263 = vld [vmem:[%s3 + $0xc0] sm:$0xff]
  %v264 = vld [vmem:[%s3 + $0xc8] sm:$0xff]
  %v265 = vld [vmem:[%s3 + $0xd0] sm:$0xff]
  %v266 = vld [vmem:[%s3 + $0xd8] sm:$0xff]
  %v267 = vld [vmem:[%s3 + $0xe0] sm:$0xff]
  %v268 = vld [vmem:[%s3 + $0xe8] sm:$0xff]
  %v269 = vld [vmem:[%s3 + $0xf0] sm:$0xff]
  %v270 = vld [vmem:[%s3 + $0xf8] sm:$0xff]
  %v271 = vld [vmem:[%s4] sm:$0x3]
  %v273 = vlaneseq
  %v274 = vshrl.u32 %v273, 7
  %v275 = vsub.s32 0, %v274
  %v276 = vrot.slane %v271, %v275
  %v277 = vlaneseq
  %v278 = vshrl.u32 %v277, 7
  %v279 = vsub.s32 1, %v278
  %v280 = vrot.slane %v271, %v279
  %v315 = vunpack.c.l.b16 %v239
  %v316 = vunpack.c.h.b16 %v239
  %v317 = vunpack.c.l.b16 %v240
  %v318 = vunpack.c.h.b16 %v240
  %v319 = vunpack.c.l.b16 %v241
  %v320 = vunpack.c.h.b16 %v241
  %v321 = vunpack.c.l.b16 %v242
  %v322 = vunpack.c.h.b16 %v242
  %v323 = vunpack.c.l.b16 %v243
  %v324 = vunpack.c.h.b16 %v243
  %v325 = vunpack.c.l.b16 %v244
  %v326 = vunpack.c.h.b16 %v244
  %v327 = vunpack.c.l.b16 %v245
  %v328 = vunpack.c.h.b16 %v245
  %v329 = vunpack.c.l.b16 %v246
  %v330 = vunpack.c.h.b16 %v246
  %v331 = vunpack.c.l.b16 %v247
  %v332 = vunpack.c.h.b16 %v247
  %v333 = vunpack.c.l.b16 %v248
  %v334 = vunpack.c.h.b16 %v248
  %v335 = vunpack.c.l.b16 %v249
  %v336 = vunpack.c.h.b16 %v249
  %v337 = vunpack.c.l.b16 %v250
  %v338 = vunpack.c.h.b16 %v250
  %v339 = vunpack.c.l.b16 %v251
  %v340 = vunpack.c.h.b16 %v251
  %v341 = vunpack.c.l.b16 %v252
  %v342 = vunpack.c.h.b16 %v252
  %v343 = vunpack.c.l.b16 %v253
  %v344 = vunpack.c.h.b16 %v253
  %v345 = vunpack.c.l.b16 %v254
  %v346 = vunpack.c.h.b16 %v254
  %v347 = vunpack.c.l.b16 %v255
  %v348 = vunpack.c.h.b16 %v255
  %v349 = vunpack.c.l.b16 %v256
  %v350 = vunpack.c.h.b16 %v256
  %v351 = vunpack.c.l.b16 %v257
  %v352 = vunpack.c.h.b16 %v257
  %v353 = vunpack.c.l.b16 %v258
  %v354 = vunpack.c.h.b16 %v258
  %v355 = vunpack.c.l.b16 %v259
  %v356 = vunpack.c.h.b16 %v259
  %v357 = vunpack.c.l.b16 %v260
  %v358 = vunpack.c.h.b16 %v260
  %v359 = vunpack.c.l.b16 %v261
  %v360 = vunpack.c.h.b16 %v261
  %v361 = vunpack.c.l.b16 %v262
  %v362 = vunpack.c.h.b16 %v262
  %v363 = vunpack.c.l.b16 %v263
  %v364 = vunpack.c.h.b16 %v263
  %v365 = vunpack.c.l.b16 %v264
  %v366 = vunpack.c.h.b16 %v264
  %v367 = vunpack.c.l.b16 %v265
  %v368 = vunpack.c.h.b16 %v265
  %v369 = vunpack.c.l.b16 %v266
  %v370 = vunpack.c.h.b16 %v266
  %v371 = vunpack.c.l.b16 %v267
  %v372 = vunpack.c.h.b16 %v267
  %v373 = vunpack.c.l.b16 %v268
  %v374 = vunpack.c.h.b16 %v268
  %v375 = vunpack.c.l.b16 %v269
  %v376 = vunpack.c.h.b16 %v269
  %v377 = vunpack.c.l.b16 %v270
  %v378 = vunpack.c.h.b16 %v270
  %v379 = vpack.c.b16 %v317, %v315
  %v380 = vpack.c.b16 %v318, %v316
  %v381 = vpack.c.b16 %v321, %v319
  %v382 = vpack.c.b16 %v322, %v320
  %v383 = vpack.c.b16 %v325, %v323
  %v384 = vpack.c.b16 %v326, %v324
  %v385 = vpack.c.b16 %v329, %v327
  %v386 = vpack.c.b16 %v330, %v328
  %v387 = vpack.c.b16 %v333, %v331
  %v388 = vpack.c.b16 %v334, %v332
  %v389 = vpack.c.b16 %v337, %v335
  %v390 = vpack.c.b16 %v338, %v336
  %v391 = vpack.c.b16 %v341, %v339
  %v392 = vpack.c.b16 %v342, %v340
  %v393 = vpack.c.b16 %v345, %v343
  %v394 = vpack.c.b16 %v346, %v344
  %v395 = vpack.c.b16 %v349, %v347
  %v396 = vpack.c.b16 %v350, %v348
  %v397 = vpack.c.b16 %v353, %v351
  %v398 = vpack.c.b16 %v354, %v352
  %v399 = vpack.c.b16 %v357, %v355
  %v400 = vpack.c.b16 %v358, %v356
  %v401 = vpack.c.b16 %v361, %v359
  %v402 = vpack.c.b16 %v362, %v360
  %v403 = vpack.c.b16 %v365, %v363
  %v404 = vpack.c.b16 %v366, %v364
  %v405 = vpack.c.b16 %v369, %v367
  %v406 = vpack.c.b16 %v370, %v368
  %v407 = vpack.c.b16 %v373, %v371
  %v408 = vpack.c.b16 %v374, %v372
  %v409 = vpack.c.b16 %v377, %v375
  %v410 = vpack.c.b16 %v378, %v376
  %443 = vmatprep.subr.bf16.mxu0 %v380
  %444 = vmatpush1.bf16.msra.mxu0 %v379
  %445 = vmatprep.subr.bf16.mxu0 %v382
  %446 = vmatpush1.bf16.msra.mxu0 %v381
  %447 = vmatprep.subr.bf16.mxu0 %v384
  %448 = vmatpush1.bf16.msra.mxu0 %v383
  %449 = vmatprep.subr.bf16.mxu0 %v386
  %450 = vmatpush1.bf16.msra.mxu0 %v385
  %451 = vmatprep.subr.bf16.mxu0 %v388
  %452 = vmatpush1.bf16.msra.mxu0 %v387
  %453 = vmatprep.subr.bf16.mxu0 %v390
  %454 = vmatpush1.bf16.msra.mxu0 %v389
  %455 = vmatprep.subr.bf16.mxu0 %v392
  %456 = vmatpush1.bf16.msra.mxu0 %v391
  %457 = vmatprep.subr.bf16.mxu0 %v394
  %458 = vmatpush1.bf16.msra.mxu0 %v393
  %459 = vmatprep.subr.bf16.mxu0 %v396
  %460 = vmatpush1.bf16.msra.mxu0 %v395
  %461 = vmatprep.subr.bf16.mxu0 %v398
  %462 = vmatpush1.bf16.msra.mxu0 %v397
  %463 = vmatprep.subr.bf16.mxu0 %v400
  %464 = vmatpush1.bf16.msra.mxu0 %v399
  %465 = vmatprep.subr.bf16.mxu0 %v402
  %466 = vmatpush1.bf16.msra.mxu0 %v401
  %467 = vmatprep.subr.bf16.mxu0 %v404
  %468 = vmatpush1.bf16.msra.mxu0 %v403
  %469 = vmatprep.subr.bf16.mxu0 %v406
  %470 = vmatpush1.bf16.msra.mxu0 %v405
  %471 = vmatprep.subr.bf16.mxu0 %v408
  %472 = vmatpush1.bf16.msra.mxu0 %v407
  %473 = vmatprep.subr.bf16.mxu0 %v410
  %474 = vmatpush1.bf16.msra.mxu0 %v409
  %475 = vmatprep.mubr.bf16.mxu0 %v232
  %476 = vmatmul.mubr.bf16.gmra.mrb[0].mxu0 %v231
  %v477 = vpop.f32.mrb[0].mxu0
  %v478 = vadd.f32 %v276, %v477
  %v479 = vpop.f32.mrb[0].mxu0
  %v480 = vadd.f32 %v280, %v479
  %v481 = vpop.f32.mrb[0].mxu0
  %v482 = vadd.f32 %v276, %v481
  %v483 = vpop.f32.mrb[0].mxu0
  %v484 = vadd.f32 %v280, %v483
  %485 = vmatprep.mubr.bf16.mxu0 %v234
  %486 = vmatmul.mubr.bf16.gmra.mrb[0].mxu0 %v233
  %v487 = vpop.f32.mrb[0].mxu0
  %v488 = vadd.f32 %v276, %v487
  %v489 = vpop.f32.mrb[0].mxu0
  %v490 = vadd.f32 %v280, %v489
  %v491 = vpop.f32.mrb[0].mxu0
  %v492 = vadd.f32 %v276, %v491
  %v493 = vpop.f32.mrb[0].mxu0
  %v494 = vadd.f32 %v280, %v493
  %495 = vmatprep.mubr.bf16.mxu0 %v236
  %496 = vmatmul.mubr.bf16.gmra.mrb[0].mxu0 %v235
  %v497 = vpop.f32.mrb[0].mxu0
  %v498 = vadd.f32 %v276, %v497
  %v499 = vpop.f32.mrb[0].mxu0
  %v500 = vadd.f32 %v280, %v499
  %v501 = vpop.f32.mrb[0].mxu0
  %v502 = vadd.f32 %v276, %v501
  %v503 = vpop.f32.mrb[0].mxu0
  %v504 = vadd.f32 %v280, %v503
  %505 = vmatprep.mubr.bf16.mxu0 %v238
  %506 = vmatmul.mubr.bf16.gmra.mrb[0].mxu0 %v237
  %v507 = vpop.f32.mrb[0].mxu0
  %v508 = vadd.f32 %v276, %v507
  %v509 = vpop.f32.mrb[0].mxu0
  %v510 = vadd.f32 %v280, %v509
  %v511 = vpop.f32.mrb[0].mxu0
  %v512 = vpop.f32.mrb[0].mxu0
  %513 = vdwg.mxu0
  %v514 = vtanh.pop %v478
  %v515 = vtanh.pop %v480
  %v516 = vtanh.pop %v482
  %v517 = vtanh.pop %v484
  %v518 = vtanh.pop %v488
  %v519 = vtanh.pop %v490
  %v520 = vtanh.pop %v492
  %v521 = vtanh.pop %v494
  %v522 = vtanh.pop %v498
  %v523 = vtanh.pop %v500
  %v524 = vtanh.pop %v502
  %v525 = vtanh.pop %v504
  %v526 = vtanh.pop %v508
  %v527 = vtanh.pop %v510
  %v528 = vpack.c.bf16 %v516, %v514
  %v529 = vpack.c.bf16 %v517, %v515
  %v530 = vpack.c.bf16 %v520, %v518
  %v531 = vpack.c.bf16 %v521, %v519
  %v532 = vpack.c.bf16 %v524, %v522
  %v533 = vpack.c.bf16 %v525, %v523
  %v534 = vpack.c.bf16 %v526, %v526
  %v535 = vpack.c.bf16 %v527, %v527
  %v536 = vld [vmem:[%s5] sm:$0xf]
  %v537 = vld [vmem:[%s5 + $0x4] sm:$0xf]
  %v538 = vld [vmem:[%s5 + $0x8] sm:$0xf]
  %v539 = vld [vmem:[%s5 + $0xc] sm:$0xf]
  %v540 = vld [vmem:[%s5 + $0x10] sm:$0xf]
  %v541 = vld [vmem:[%s5 + $0x14] sm:$0xf]
  %v542 = vld [vmem:[%s5 + $0x18] sm:$0xf]
  %v543 = vld [vmem:[%s5 + $0x1c] sm:$0xf]
  %v544 = vld [vmem:[%s5 + $0x20] sm:$0xf]
  %v545 = vld [vmem:[%s5 + $0x24] sm:$0xf]
  %v546 = vld [vmem:[%s5 + $0x28] sm:$0xf]
  %v547 = vld [vmem:[%s5 + $0x2c] sm:$0xf]
  %v548 = vld [vmem:[%s5 + $0x30] sm:$0xf]
  %v549 = vld [vmem:[%s5 + $0x34] sm:$0xf]
  %v550 = vld [vmem:[%s5 + $0x38] sm:$0xf]
  %v551 = vld [vmem:[%s5 + $0x3c] sm:$0xf]
  %v552 = vld [vmem:[%s5 + $0x40] sm:$0xf]
  %v553 = vld [vmem:[%s5 + $0x44] sm:$0xf]
  %v554 = vld [vmem:[%s5 + $0x48] sm:$0xf]
  %v555 = vld [vmem:[%s5 + $0x4c] sm:$0xf]
  %v556 = vld [vmem:[%s5 + $0x50] sm:$0xf]
  %v557 = vld [vmem:[%s5 + $0x54] sm:$0xf]
  %v558 = vld [vmem:[%s5 + $0x58] sm:$0xf]
  %v559 = vld [vmem:[%s5 + $0x5c] sm:$0xf]
  %v560 = vld [vmem:[%s5 + $0x60] sm:$0xf]
  %v561 = vld [vmem:[%s5 + $0x64] sm:$0xf]
  %v562 = vld [vmem:[%s5 + $0x68] sm:$0xf]
  %v563 = vld [vmem:[%s5 + $0x6c] sm:$0xf]
  %v564 = vld [vmem:[%s5 + $0x70] sm:$0xf]
  %v565 = vld [vmem:[%s5 + $0x74] sm:$0xf]
  %v566 = vld [vmem:[%s5 + $0x78] sm:$0xf]
  %v567 = vld [vmem:[%s5 + $0x7c] sm:$0xf]
  %v568 = vld [vmem:[%s6] sm:$0x1]
  %v570 = vlaneseq
  %v571 = vshrl.u32 %v570, 7
  %v572 = vsub.s32 0, %v571
  %v573 = vrot.slane %v568, %v572
  %v607 = vunpack.c.l.b16 %v536
  %v608 = vunpack.c.l.b16 %v537
  %v609 = vunpack.c.l.b16 %v538
  %v610 = vunpack.c.l.b16 %v539
  %v611 = vunpack.c.l.b16 %v540
  %v612 = vunpack.c.l.b16 %v541
  %v613 = vunpack.c.l.b16 %v542
  %v614 = vunpack.c.l.b16 %v543
  %v615 = vunpack.c.l.b16 %v544
  %v616 = vunpack.c.l.b16 %v545
  %v617 = vunpack.c.l.b16 %v546
  %v618 = vunpack.c.l.b16 %v547
  %v619 = vunpack.c.l.b16 %v548
  %v620 = vunpack.c.l.b16 %v549
  %v621 = vunpack.c.l.b16 %v550
  %v622 = vunpack.c.l.b16 %v551
  %v623 = vunpack.c.l.b16 %v552
  %v624 = vunpack.c.l.b16 %v553
  %v625 = vunpack.c.l.b16 %v554
  %v626 = vunpack.c.l.b16 %v555
  %v627 = vunpack.c.l.b16 %v556
  %v628 = vunpack.c.l.b16 %v557
  %v629 = vunpack.c.l.b16 %v558
  %v630 = vunpack.c.l.b16 %v559
  %v631 = vunpack.c.l.b16 %v560
  %v632 = vunpack.c.l.b16 %v561
  %v633 = vunpack.c.l.b16 %v562
  %v634 = vunpack.c.l.b16 %v563
  %v635 = vunpack.c.l.b16 %v564
  %v636 = vunpack.c.l.b16 %v565
  %v637 = vunpack.c.l.b16 %v566
  %v638 = vunpack.c.l.b16 %v567
  %v639 = vpack.c.b16 %v608, %v607
  %v640 = vpack.c.b16 %v610, %v609
  %v641 = vpack.c.b16 %v612, %v611
  %v642 = vpack.c.b16 %v614, %v613
  %v643 = vpack.c.b16 %v616, %v615
  %v644 = vpack.c.b16 %v618, %v617
  %v645 = vpack.c.b16 %v620, %v619
  %v646 = vpack.c.b16 %v622, %v621
  %v647 = vpack.c.b16 %v624, %v623
  %v648 = vpack.c.b16 %v626, %v625
  %v649 = vpack.c.b16 %v628, %v627
  %v650 = vpack.c.b16 %v630, %v629
  %v651 = vpack.c.b16 %v632, %v631
  %v652 = vpack.c.b16 %v634, %v633
  %v653 = vpack.c.b16 %v636, %v635
  %v654 = vpack.c.b16 %v638, %v637
  %671 = vmatprep.subr.bf16.mxu0 0
  %672 = vmatpush1.bf16.msra.mxu0 %v639
  %673 = vmatprep.subr.bf16.mxu0 0
  %674 = vmatpush1.bf16.msra.mxu0 %v640
  %675 = vmatprep.subr.bf16.mxu0 0
  %676 = vmatpush1.bf16.msra.mxu0 %v641
  %677 = vmatprep.subr.bf16.mxu0 0
  %678 = vmatpush1.bf16.msra.mxu0 %v642
  %679 = vmatprep.subr.bf16.mxu0 0
  %680 = vmatpush1.bf16.msra.mxu0 %v643
  %681 = vmatprep.subr.bf16.mxu0 0
  %682 = vmatpush1.bf16.msra.mxu0 %v644
  %683 = vmatprep.subr.bf16.mxu0 0
  %684 = vmatpush1.bf16.msra.mxu0 %v645
  %685 = vmatprep.subr.bf16.mxu0 0
  %686 = vmatpush1.bf16.msra.mxu0 %v646
  %687 = vmatprep.subr.bf16.mxu0 0
  %688 = vmatpush1.bf16.msra.mxu0 %v647
  %689 = vmatprep.subr.bf16.mxu0 0
  %690 = vmatpush1.bf16.msra.mxu0 %v648
  %691 = vmatprep.subr.bf16.mxu0 0
  %692 = vmatpush1.bf16.msra.mxu0 %v649
  %693 = vmatprep.subr.bf16.mxu0 0
  %694 = vmatpush1.bf16.msra.mxu0 %v650
  %695 = vmatprep.subr.bf16.mxu0 0
  %696 = vmatpush1.bf16.msra.mxu0 %v651
  %697 = vmatprep.subr.bf16.mxu0 0
  %698 = vmatpush1.bf16.msra.mxu0 %v652
  %699 = vmatprep.subr.bf16.mxu0 0
  %700 = vmatpush1.bf16.msra.mxu0 %v653
  %701 = vmatprep.subr.bf16.mxu0 0
  %702 = vmatpush1.bf16.msra.mxu0 %v654
  %703 = vmatprep.mubr.bf16.mxu0 %v529
  %704 = vmatmul.mubr.bf16.gmra.mrb[0].mxu0 %v528
  %v705 = vpop.f32.mrb[0].mxu0
  %v706 = vadd.f32 %v573, %v705
  %v707 = vpop.f32.mrb[0].mxu0
  %v708 = vpop.f32.mrb[0].mxu0
  %v709 = vadd.f32 %v573, %v708
  %v710 = vpop.f32.mrb[0].mxu0
  %711 = vmatprep.mubr.bf16.mxu0 %v531
  %712 = vmatmul.mubr.bf16.gmra.mrb[0].mxu0 %v530
  %v713 = vpop.f32.mrb[0].mxu0
  %v714 = vadd.f32 %v573, %v713
  %v715 = vpop.f32.mrb[0].mxu0
  %v716 = vpop.f32.mrb[0].mxu0
  %v717 = vadd.f32 %v573, %v716
  %v718 = vpop.f32.mrb[0].mxu0
  %719 = vmatprep.mubr.bf16.mxu0 %v533
  %720 = vmatmul.mubr.bf16.gmra.mrb[0].mxu0 %v532
  %v721 = vpop.f32.mrb[0].mxu0
  %v722 = vadd.f32 %v573, %v721
  %v723 = vpop.f32.mrb[0].mxu0
  %v724 = vpop.f32.mrb[0].mxu0
  %v725 = vadd.f32 %v573, %v724
  %v726 = vpop.f32.mrb[0].mxu0
  %727 = vmatprep.mubr.bf16.mxu0 %v535
  %728 = vmatmul.mubr.bf16.gmra.mrb[0].mxu0 %v534
  %v729 = vpop.f32.mrb[0].mxu0
  %v730 = vadd.f32 %v573, %v729
  %v731 = vpop.f32.mrb[0].mxu0
  %v732 = vpop.f32.mrb[0].mxu0
  %v733 = vpop.f32.mrb[0].mxu0
  %734 = vdwg.mxu0
  %vm735 = vcmask 523264
  %736 = vst.msk [vmem:[%s7] sm:$0xff] %vm735, %v706
  %737 = vst.msk [vmem:[%s7 + $0x8] sm:$0xff] %vm735, %v709
  %738 = vst.msk [vmem:[%s7 + $0x10] sm:$0xff] %vm735, %v714
  %739 = vst.msk [vmem:[%s7 + $0x18] sm:$0xff] %vm735, %v717
  %740 = vst.msk [vmem:[%s7 + $0x20] sm:$0xff] %vm735, %v722
  %741 = vst.msk [vmem:[%s7 + $0x28] sm:$0xff] %vm735, %v725
  %vm742 = vcmask 517120
  %743 = vst.msk [vmem:[%s7 + $0x30] sm:$0x3] %vm742, %v730
  // Predicated region
  $region30: #{_base_mlp_forward.1} parent=0 // pred_check
    _
  $region31: #{_base_mlp_forward.1} parent=0 // pred_check_branch
    %745 = sbr.rel (0) target = $region33
  $region32: #{_base_mlp_forward.1} parent=0 // pred_region
    _
  $region33: #{_base_mlp_forward.1} parent=0 // pred_fallthru
    _
  // Predicated region
  $region34: #{_base_mlp_forward.1} parent=0 // pred_check
    _
  $region35: #{_base_mlp_forward.1} parent=0 // pred_check_branch
    %747 = sbr.rel (0) target = $region37
  $region36: #{_base_mlp_forward.1} parent=0 // pred_region
    _
  $region37: #{_base_mlp_forward.1} parent=0 // pred_fallthru
    _

</llo_original>
